<compile_context>
chip_gen: v7x
topology: tpu7x:2x2x1
jax: 0.10.0
libtpu: 0.0.40
codegen_flags: <defaults>
</compile_context>

<pallas_src>
import functools
import math

import jax
import jax.numpy as jnp
from jax import lax
from jax.experimental import pallas as pl
from jax.experimental.pallas import tpu as pltpu

_LANE = 128
_SUBLANE = 16   # covers f32 (8) and bf16 (16) sublane packing


def _round_up(v, m):
    return ((v + m - 1) // m) * m


def _focal_kernel(x_ref, t_ref, out_ref, acc_ref, *,
                  alpha_pos, alpha_neg, beta,
                  tiles_per_split, full_tiles, rem,
                  tile_rows, acc_rows, all_full):
    s = pl.program_id(0)          # split (parallel axis: one per TensorCore)
    i = pl.program_id(1)          # tile within split (reduction axis)

    @pl.when(i == 0)
    def _init():
        acc_ref[...] = jnp.zeros_like(acc_ref)

    def tile_loss():
        x = x_ref[...].astype(jnp.float32)
        t = t_ref[...].astype(jnp.float32)
        e = jnp.exp(-jnp.abs(x))                                  # shared EUP exp
        # stable BCE-with-logits: max(x,0) - x*t + log(1 + exp(-|x|))
        bce = jnp.maximum(x, 0.0) - x * t + jnp.log(1.0 + e)
        inv = pl.reciprocal(1.0 + e, approx=False)                # exact 1/(1+e)
        is_pos = t == 1.0
        # sigmoid(x)   = inv   (x>=0)   e*inv (x<0)
        # 1-sigmoid(x) = e*inv (x>=0)   inv   (x<0)
        # 1 - p_t = where(is_pos, 1-sigmoid, sigmoid)
        diff = jnp.logical_xor(is_pos, x >= 0.0)
        one_minus_pt = jnp.where(diff, inv, e * inv)
        alpha = jnp.where(is_pos, jnp.float32(alpha_pos), jnp.float32(alpha_neg))
        return alpha * (one_minus_pt ** beta) * bce               # integer_pow(beta)

    def fold(v):
        # (tile_rows,128) -> (acc_rows,128): VALU adds on vreg-aligned slices.
        out = v[0:acc_rows, :]
        for c in range(1, tile_rows // acc_rows):
            out = out + v[c * acc_rows:(c + 1) * acc_rows, :]
        return out

    if all_full:
        # Every grid step is a completely valid tile: no masking anywhere.
        acc_ref[...] += fold(tile_loss())
    else:
        tile_idx = s * tiles_per_split + i

        @pl.when(tile_idx < full_tiles)          # fully valid tiles: mask-free
        def _full_tile():
            acc_ref[...] += fold(tile_loss())

        if rem > 0:
            @pl.when(tile_idx == full_tiles)     # the single partial tile
            def _partial_tile():
                fl = tile_loss()
                row = lax.broadcasted_iota(jnp.int32, (tile_rows, _LANE), 0)
                col = lax.broadcasted_iota(jnp.int32, (tile_rows, _LANE), 1)
                fl = jnp.where(row * _LANE + col < rem, fl, 0.0)
                acc_ref[...] += fold(fl)
        # grid steps with tile_idx beyond the data contribute nothing.

    @pl.when(i == pl.num_programs(1) - 1)
    def _finalize():
        out_ref[0, 0] = jnp.sum(acc_ref[...])    # one small XLU reduce per split


def _default_num_splits():
    """2 on multi-TensorCore chips (v7x, v4/v5p megacore), 1 on v5e/v6e."""
    try:
        kind = jax.devices()[0].device_kind.lower()
    except Exception:
        return 2
    single_tc = ("v5e", "v5 lite", "v5lite", "v6e", "v6 lite", "v6lite")
    return 1 if any(tag in kind for tag in single_tc) else 2


def binary_focal_loss(logits, targets, *, alpha_pos=2, alpha_neg=1, beta=4,
                      reduction='mean', weights=None, eps=1e-6,
                      tile_rows=4096, num_splits=None):
    """Pallas implementation of BinaryFocalLoss.forward.

    `eps` is accepted for API parity but, exactly like the PyTorch module's
    forward, it is never used.  Targets are streamed in their native dtype
    (bf16/int8 targets halve that stream's HBM bytes); cast happens in-kernel.
    """
    assert reduction in ('mean', 'sum'), \
        "only reduction='mean'/'sum' implemented in the kernel"
    assert weights is None, "per-class `weights` not wired up"
    # TODO(synk): reduction='none' (elementwise output) and per-class `weights`.

    out_dtype = logits.dtype
    n_valid = int(logits.size)
    assert int(targets.size) == n_valid   # targets.view_as(logits)

    flat_x = logits.reshape(-1)           # no-copy for contiguous inputs
    flat_t = targets.reshape(-1)

    rows = pl.cdiv(n_valid, _LANE)
    lane_pad = rows * _LANE - n_valid
    if lane_pad:                          # < 128 elements; only when numel % 128 != 0
        flat_x = jnp.pad(flat_x, (0, lane_pad))
        flat_t = jnp.pad(flat_t, (0, lane_pad))
    x2 = flat_x.reshape(rows, _LANE)
    t2 = flat_t.reshape(rows, _LANE)

    if num_splits is None:
        num_splits = _default_num_splits()
    num_splits = max(1, int(num_splits))

    tile_rows = max(_SUBLANE,
                    min(int(tile_rows), _round_up(pl.cdiv(rows, num_splits), _SUBLANE)))
    tile_rows = _round_up(tile_rows, _SUBLANE)

    total_tiles = pl.cdiv(rows, tile_rows)
    num_splits = min(num_splits, total_tiles)
    tiles_per_split = pl.cdiv(total_tiles, num_splits)
    grid_total = num_splits * tiles_per_split

    tile_elems = tile_rows * _LANE
    full_tiles = n_valid // tile_elems
    rem = n_valid - full_tiles * tile_elems
    all_full = (rem == 0) and (grid_total == full_tiles)

    acc_rows = math.gcd(tile_rows, _LANE)   # small (<=128,128) f32 accumulator

    kernel = functools.partial(
        _focal_kernel,
        alpha_pos=float(alpha_pos), alpha_neg=float(alpha_neg), beta=int(beta),
        tiles_per_split=int(tiles_per_split), full_tiles=int(full_tiles),
        rem=int(rem), tile_rows=int(tile_rows), acc_rows=int(acc_rows),
        all_full=bool(all_full),
    )

    last_block = total_tiles - 1
    if grid_total == total_tiles:
        in_map = lambda s, i: (s * tiles_per_split + i, 0)
    else:
        # Over-provisioned grid steps clamp to the last in-range block (their
        # contribution is skipped in-kernel) so block indices never go OOB.
        in_map = lambda s, i: (jnp.minimum(s * tiles_per_split + i, last_block), 0)

    blk_bytes = tile_elems * (x2.dtype.itemsize + t2.dtype.itemsize)
    vmem_limit = min(int(2 * blk_bytes                 # double-buffered inputs
                         + 4 * tile_elems * 4          # f32 temporaries headroom
                         + acc_rows * _LANE * 4        # accumulator
                         + (2 << 20)),
                     100 << 20)

    partials = pl.pallas_call(
        kernel,
        out_shape=jax.ShapeDtypeStruct((num_splits, 1), jnp.float32),
        grid_spec=pltpu.PrefetchScalarGridSpec(
            num_scalar_prefetch=0,
            grid=(num_splits, tiles_per_split),
            in_specs=[
                pl.BlockSpec((tile_rows, _LANE), in_map),
                pl.BlockSpec((tile_rows, _LANE), in_map),
            ],
            out_specs=pl.BlockSpec((1, 1), lambda s, i: (s, 0),
                                   memory_space=pltpu.SMEM),
            scratch_shapes=[pltpu.VMEM((acc_rows, _LANE), jnp.float32)],
        ),
        compiler_params=pltpu.CompilerParams(
            dimension_semantics=("parallel", "arbitrary"),
            vmem_limit_bytes=vmem_limit),
    )(x2, t2)

    total = jnp.sum(partials)
    if reduction == 'mean':
        total = total / jnp.float32(n_valid)
    return total.astype(out_dtype)


def _reference(logits, targets, alpha_pos=2, alpha_neg=1, beta=4):
    x = logits.astype(jnp.float32)
    t = targets.astype(jnp.float32)
    bce = jnp.maximum(x, 0.0) - x * t + jnp.log1p(jnp.exp(-jnp.abs(x)))
    p = jax.nn.sigmoid(x)
    p_t = jnp.where(t == 1.0, p, 1.0 - p)
    loss = jnp.where(t == 1.0, float(alpha_pos), float(alpha_neg)) \
        * (1.0 - p_t) ** beta * bce
    return loss.mean()


if __name__ == "__main__":
    key = jax.random.PRNGKey(0)
    k1, k2, k3, k4 = jax.random.split(key, 4)

    # NCHW, as produced by a PyTorch conv head.
    logits = jax.random.normal(k1, (2, 4, 16, 16), dtype=jnp.float32)
    targets = (jax.random.uniform(k2, (2, 4, 16, 16)) > 0.7).astype(jnp.float32)

    loss = binary_focal_loss(logits, targets)
    jax.block_until_ready(loss)
    ref = _reference(logits, targets)
    assert jnp.allclose(loss, ref, rtol=5e-4, atol=1e-6), (loss, ref)

    # Odd row count: multi-tile grid, 2-way split, ragged (masked) tail tile.
    logits2 = jax.random.normal(k3, (3, 2, 40, 40), dtype=jnp.float32)
    targets2 = (jax.random.uniform(k4, (3, 2, 40, 40)) > 0.5).astype(jnp.float32)
    loss2 = binary_focal_loss(logits2, targets2, tile_rows=16, num_splits=2)
    jax.block_until_ready(loss2)
    ref2 = _reference(logits2, targets2)
    assert jnp.allclose(loss2, ref2, rtol=5e-4, atol=1e-6), (loss2, ref2)

    # bf16 logits streamed in native dtype (cast to f32 inside the kernel).
    logits3 = logits2.astype(jnp.bfloat16)
    loss3 = binary_focal_loss(logits3, targets2, tile_rows=16, num_splits=2)
    jax.block_until_ready(loss3)
    ref3 = _reference(logits3.astype(jnp.float32), targets2)
    assert jnp.allclose(loss3.astype(jnp.float32), ref3, rtol=2e-2, atol=1e-3), (loss3, ref3)

    print("KERNEL_OK")
</pallas_src>

<mosaic_0001>
module attributes {stable_mosaic.version = 11 : i64} {
  func.func @_focal_kernel(%arg0: i32, %arg1: i32, %arg2: memref<16x128xf32, #tpu.memory_space<vmem>>, %arg3: memref<16x128xf32, #tpu.memory_space<vmem>>, %arg4: memref<1x1xf32, #tpu.memory_space<smem>>, %arg5: memref<16x128xf32, #tpu.memory_space<vmem>>) attributes {dimension_semantics = [#tpu.dimension_semantics<parallel>, #tpu.dimension_semantics<arbitrary>], iteration_bounds = array<i64: 1, 1>, scalar_prefetch = 0 : i64, scratch_operands = 1 : i64, tpu.core_type = #tpu.core_type<tc>, window_params = [{transform_indices = @transform_0, window_bounds = array<i64: 16, 128>}, {transform_indices = @transform_1, window_bounds = array<i64: 16, 128>}, {transform_indices = @transform_2, window_bounds = array<i64: 1, 1>}]} {
    %c0_i32 = arith.constant 0 : i32
    %0 = arith.cmpi eq, %arg1, %c0_i32 : i32
    %1 = arith.extui %0 : i1 to i32
    %c0_i32_0 = arith.constant 0 : i32
    %2 = arith.cmpi ne, %1, %c0_i32_0 : i32
    scf.if %2 {
      %cst_17 = arith.constant 0.000000e+00 : f32
      %40 = vector.broadcast %cst_17 : f32 to vector<16x128xf32>
      %c0_18 = arith.constant 0 : index
      %c0_19 = arith.constant 0 : index
      %41 = vector.load %arg5[%c0_18, %c0_19] : memref<16x128xf32, #tpu.memory_space<vmem>>, vector<16x128xf32>
      tpu.vector_store %arg5[%c0_18, %c0_19], %40 {strides = array<i32>} : memref<16x128xf32, #tpu.memory_space<vmem>>, vector<16x128xf32>,
    } else {
    }
    %c0 = arith.constant 0 : index
    %c0_1 = arith.constant 0 : index
    %3 = vector.load %arg5[%c0, %c0_1] : memref<16x128xf32, #tpu.memory_space<vmem>>, vector<16x128xf32>
    %c0_2 = arith.constant 0 : index
    %c0_3 = arith.constant 0 : index
    %4 = vector.load %arg2[%c0_2, %c0_3] : memref<16x128xf32, #tpu.memory_space<vmem>>, vector<16x128xf32>
    %c0_4 = arith.constant 0 : index
    %c0_5 = arith.constant 0 : index
    %5 = vector.load %arg3[%c0_4, %c0_5] : memref<16x128xf32, #tpu.memory_space<vmem>>, vector<16x128xf32>
    %6 = math.absf %4 : vector<16x128xf32>
    %cst = arith.constant 0.000000e+00 : f32
    %7 = vector.broadcast %cst : f32 to vector<16x128xf32>
    %8 = arith.subf %7, %6 : vector<16x128xf32>
    %9 = math.exp %8 : vector<16x128xf32>
    %cst_6 = arith.constant 0.000000e+00 : f32
    %10 = vector.broadcast %cst_6 : f32 to vector<16x128xf32>
    %11 = arith.maximumf %4, %10 : vector<16x128xf32>
    %12 = arith.mulf %4, %5 : vector<16x128xf32>
    %13 = arith.subf %11, %12 : vector<16x128xf32>
    %cst_7 = arith.constant 1.000000e+00 : f32
    %14 = vector.broadcast %cst_7 : f32 to vector<16x128xf32>
    %15 = arith.addf %14, %9 : vector<16x128xf32>
    %16 = math.log %15 : vector<16x128xf32>
    %17 = arith.addf %13, %16 : vector<16x128xf32>
    %cst_8 = arith.constant 1.000000e+00 : f32
    %18 = vector.broadcast %cst_8 : f32 to vector<16x128xf32>
    %19 = arith.addf %18, %9 : vector<16x128xf32>
    %20 = tpu.reciprocal %19 : vector<16x128xf32> -> vector<16x128xf32>
    %cst_9 = arith.constant 1.000000e+00 : f32
    %21 = vector.broadcast %cst_9 : f32 to vector<16x128xf32>
    %22 = arith.cmpf oeq, %5, %21 : vector<16x128xf32>
    %cst_10 = arith.constant 0.000000e+00 : f32
    %23 = vector.broadcast %cst_10 : f32 to vector<16x128xf32>
    %24 = arith.cmpf oge, %4, %23 : vector<16x128xf32>
    %25 = arith.xori %22, %24 : vector<16x128xi1>
    %26 = arith.mulf %9, %20 : vector<16x128xf32>
    %27 = arith.select %25, %20, %26 : vector<16x128xi1>, vector<16x128xf32>
    %cst_11 = arith.constant 2.000000e+00 : f32
    %cst_12 = arith.constant 1.000000e+00 : f32
    %28 = vector.broadcast %cst_11 : f32 to vector<16x128xf32>
    %29 = vector.broadcast %cst_12 : f32 to vector<16x128xf32>
    %30 = arith.select %22, %28, %29 : vector<16x128xi1>, vector<16x128xf32>
    %31 = arith.mulf %27, %27 : vector<16x128xf32>
    %32 = arith.mulf %31, %31 : vector<16x128xf32>
    %33 = arith.mulf %30, %32 : vector<16x128xf32>
    %34 = arith.mulf %33, %17 : vector<16x128xf32>
    %35 = arith.addf %3, %34 : vector<16x128xf32>
    %c0_13 = arith.constant 0 : index
    %c0_14 = arith.constant 0 : index
    %36 = vector.load %arg5[%c0_13, %c0_14] : memref<16x128xf32, #tpu.memory_space<vmem>>, vector<16x128xf32>
    tpu.vector_store %arg5[%c0_13, %c0_14], %35 {strides = array<i32>} : memref<16x128xf32, #tpu.memory_space<vmem>>, vector<16x128xf32>,
    %c0_i32_15 = arith.constant 0 : i32
    %37 = arith.cmpi eq, %arg1, %c0_i32_15 : i32
    %38 = arith.extui %37 : i1 to i32
    %c0_i32_16 = arith.constant 0 : i32
    %39 = arith.cmpi ne, %38, %c0_i32_16 : i32
    scf.if %39 {
      %c0_17 = arith.constant 0 : index
      %c0_18 = arith.constant 0 : index
      %40 = vector.load %arg5[%c0_17, %c0_18] : memref<16x128xf32, #tpu.memory_space<vmem>>, vector<16x128xf32>
      %41 = vector.shape_cast %40 : vector<16x128xf32> to vector<1x16x128xf32>
      %cst_19 = arith.constant dense<0.000000e+00> : vector<1xf32>
      %42 = vector.multi_reduction <add>, %41, %cst_19 [1, 2] : vector<1x16x128xf32> to vector<1xf32>
      %43 = vector.shape_cast %42 : vector<1xf32> to vector<1x1x1xf32>
      %44 = vector.extract %43[0, 0, 0] : f32 from vector<1x1x1xf32>
      %c0_20 = arith.constant 0 : index
      %c0_21 = arith.constant 0 : index
      %45 = memref.load %arg4[%c0_20, %c0_21] : memref<1x1xf32, #tpu.memory_space<smem>>
      memref.store %44, %arg4[%c0_20, %c0_21] : memref<1x1xf32, #tpu.memory_space<smem>>
    } else {
    }
    return
  }
  func.func @transform_0(%arg0: i32, %arg1: i32) -> (i32, i32) {
    %c1_i32 = arith.constant 1 : i32
    %0 = arith.muli %arg0, %c1_i32 : i32
    %1 = arith.addi %0, %arg1 : i32
    %c0_i32 = arith.constant 0 : i32
    %c0_i32_0 = arith.constant 0 : i32
    return %1, %c0_i32 : i32, i32
  }
  func.func @transform_1(%arg0: i32, %arg1: i32) -> (i32, i32) {
    %c1_i32 = arith.constant 1 : i32
    %0 = arith.muli %arg0, %c1_i32 : i32
    %1 = arith.addi %0, %arg1 : i32
    %c0_i32 = arith.constant 0 : i32
    %c0_i32_0 = arith.constant 0 : i32
    return %1, %c0_i32 : i32, i32
  }
  func.func @transform_2(%arg0: i32, %arg1: i32) -> (i32, i32) {
    %c0_i32 = arith.constant 0 : i32
    %c0_i32_0 = arith.constant 0 : i32
    return %arg0, %c0_i32 : i32, i32
  }
}

</mosaic_0001>

<llo_original>
// kernel: tpu_custom_call.1
$region0: #{tpu_custom_call.1}
  #allocation0 [shape = 'u32[]', space=smem, size = 0x4, offset = 0x4, fixed_abs, tag = 'smem constant byte address 0x4 - core index']
  #allocation1 [shape = 'u32[144,128]{1,0:T(1,128)}', space=vmem, size = 0x12000, scoped, tag = 'internal scratch']
  #allocation2 [shape = 'f32[16,128]{1,0:T(8,128)}', space=vmem, size = 0x2000, scoped, tag = 'scratch operand']
  %s0 = inlined_call_operand.hbm [shape: f32[16,128], index: 0, kind: input, shape index: {}]
  %s1 = inlined_call_operand.hbm [shape: f32[16,128], index: 1, kind: input, shape index: {}]
  %s2 = inlined_call_operand.hbm [shape: f32[1,1], index: 2, kind: output, shape index: {}]
  %s3 = sld [smem:[#allocation0]]
  $region34: #{tpu_custom_call.1} parent=0
    _
  %s5 = ssub.s32 1, %s3
  %s6 = scalar_select 0, %s5, %s3
  $region1: #{tpu_custom_call.1} parent=0
    #allocation3 [shape = 'u8[8192]{0}', space=vmem, size = 0x2000, scoped, tag = 'input window, operand 0, single buffered']
    #allocation4 [shape = 's32[1]{0}', space=sflag, size = 0x4, scoped, tag = 'scoped memory for tpu_custom_call.1']
    #allocation5 [shape = 's32[1]{0}', space=sflag, size = 0x4, scoped, tag = 'scoped memory for tpu_custom_call.1']
    #allocation6 [shape = 'u8[8192]{0}', space=vmem, size = 0x2000, scoped, tag = 'input window, operand 1, single buffered']
    #allocation7 [shape = 's32[1]{0}', space=sflag, size = 0x4, scoped, tag = 'scoped memory for tpu_custom_call.1']
    #allocation8 [shape = 'u8[512]{0}', space=smem, size = 0x200, scoped, tag = 'output window, operand 0, single buffered']
    %7 = vsyncpa [#allocation4], 0
    %8 = vsyncpa [#allocation7], 0
    %9 = vsyncpa [#allocation5], 0
    // Predicated region
    $region2: #{tpu_custom_call.1} parent=1 // pred_check
      _
    $region3: #{tpu_custom_call.1} parent=1 // pred_check_branch
      %11 = sbr.rel (0) target = $region5
    $region4: #{tpu_custom_call.1} parent=1 // pred_region
      %s12 = sadd.s32 0, 0
      %s13 = smul.u32 2, %s12
      %s15 = ssub.s32 256, 256
      %16 = vsyncadd [#allocation4], %s15
      %s17 = smul.addr %s13, 128
      %s18 = scalar_lea.hbm %s0, %s17
      %s19 = sshll.u32 [#allocation3], 4
      %s20 = int_to_ptr.vmem [resolvable:$true] %s19
      %25 = dma.hbm_to_vmem [thread:$0]  %s18, 256, %s20, [#allocation4], 128, 128, 8
    $region5: #{tpu_custom_call.1} parent=1 // pred_fallthru
      _
    // Predicated region
    $region6: #{tpu_custom_call.1} parent=1 // pred_check
      _
    $region7: #{tpu_custom_call.1} parent=1 // pred_check_branch
      %27 = sbr.rel (0) target = $region9
    $region8: #{tpu_custom_call.1} parent=1 // pred_region
      %s28 = sadd.s32 0, 0
      %s29 = smul.u32 2, %s28
      %s31 = ssub.s32 256, 256
      %32 = vsyncadd [#allocation7], %s31
      %s33 = smul.addr %s29, 128
      %s34 = scalar_lea.hbm %s1, %s33
      %s35 = sshll.u32 [#allocation6], 4
      %s36 = int_to_ptr.vmem [resolvable:$true] %s35
      %41 = dma.hbm_to_vmem [thread:$0]  %s34, 256, %s36, [#allocation7], 128, 128, 8
    $region9: #{tpu_custom_call.1} parent=1 // pred_fallthru
      _
    // Predicated region
    $region10: #{tpu_custom_call.1} parent=1 // pred_check
      _
    $region11: #{tpu_custom_call.1} parent=1 // pred_check_branch
      %43 = sbr.rel (0) target = $region13
    $region12: #{tpu_custom_call.1} parent=1 // pred_region
      %44 = dma.done [#allocation4], 256
    $region13: #{tpu_custom_call.1} parent=1 // pred_fallthru
      _
    // Predicated region
    $region14: #{tpu_custom_call.1} parent=1 // pred_check
      _
    $region15: #{tpu_custom_call.1} parent=1 // pred_check_branch
      %46 = sbr.rel (0) target = $region17
    $region16: #{tpu_custom_call.1} parent=1 // pred_region
      %47 = dma.done [#allocation7], 256
    $region17: #{tpu_custom_call.1} parent=1 // pred_fallthru
      _
    %s48 = sadd.s32 0, 0
    %s49 = smul.u32 2, %s48
    %s50 = sadd.s32 0, 0
    %s51 = smul.u32 2, %s50
    %p52 = scmp.eq.s32.totalorder 0, 0
    // Predicated region
    $region18: #{tpu_custom_call.1} parent=1 // pred_check
      %p53 = pneg %p52
    $region19: #{tpu_custom_call.1} parent=1 // pred_check_branch
      %55 = sbr.rel (%p53) target = $region21
    $region20: #{tpu_custom_call.1} parent=1 // pred_region
      %56 = vst [vmem:[#allocation2] sm:$0xff] 0.0
      %57 = vst [vmem:[#allocation2 + $0x8] sm:$0xff] 0.0
    $region21: #{tpu_custom_call.1} parent=1 // pred_fallthru
      _
    %v58 = vld [vmem:[#allocation2] sm:$0xff]
    %v59 = vld [vmem:[#allocation2 + $0x8] sm:$0xff]
    %v60 = vld [vmem:[#allocation3] sm:$0xff]
    %v61 = vld [vmem:[#allocation3 + $0x8] sm:$0xff]
    %v62 = vld [vmem:[#allocation6] sm:$0xff]
    %v63 = vld [vmem:[#allocation6 + $0x8] sm:$0xff]
    %v64 = vand.u32 2147483647, %v60
    %v65 = vand.u32 2147483647, %v61
    %v66 = vsub.f32 0.0, %v64
    %v67 = vsub.f32 0.0, %v65
    %v68 = vmul.f32 %v66, 1.442695
    %v69 = vpow.pop %v68
    %v70 = vmul.f32 %v67, 1.442695
    %v71 = vpow.pop %v70
    %v72 = vmax.f32 %v60, 0.0
    %v73 = vmax.f32 %v61, 0.0
    %v74 = vmul.f32 %v60, %v62
    %v75 = vmul.f32 %v61, %v63
    %v76 = vsub.f32 %v72, %v74
    %v77 = vsub.f32 %v73, %v75
    %v78 = vadd.f32 %v69, 1.0
    %v79 = vadd.f32 %v71, 1.0
    %v80 = vlog2.pop %v78
    %v81 = vmul.f32 %v80, 0.6931472
    %v82 = vlog2.pop %v79
    %v83 = vmul.f32 %v82, 0.6931472
    %v84 = vadd.f32 %v76, %v81
    %v85 = vadd.f32 %v77, %v83
    %v86 = vrcp.pop %v78
    %v87 = vrcp.pop %v79
    %vm88 = vcmp.eq.f32.partialorder %v62, 1.0
    %vm89 = vcmp.eq.f32.partialorder %v63, 1.0
    %vm90 = vcmp.ge.f32.partialorder %v60, 0.0
    %vm91 = vcmp.ge.f32.partialorder %v61, 0.0
    %vm92 = vmxor %vm88, %vm90
    %vm93 = vmxor %vm89, %vm91
    %v94 = vmul.f32 %v69, %v86
    %v95 = vmul.f32 %v71, %v87
    %v96 = vsel %vm92, %v86, %v94
    %v97 = vsel %vm93, %v87, %v95
    %v98 = vsel %vm88, 2.0, 1.0
    %v99 = vsel %vm89, 2.0, 1.0
    %v100 = vmul.f32 %v96, %v96
    %v101 = vmul.f32 %v97, %v97
    %v102 = vmul.f32 %v100, %v100
    %v103 = vmul.f32 %v101, %v101
    %v104 = vmul.f32 %v98, %v102
    %v105 = vmul.f32 %v99, %v103
    %v106 = vmul.f32 %v104, %v84
    %v107 = vmul.f32 %v105, %v85
    %v108 = vadd.f32 %v58, %v106
    %v109 = vadd.f32 %v59, %v107
    %110 = vst [vmem:[#allocation2] sm:$0xff] %v108
    %111 = vst [vmem:[#allocation2 + $0x8] sm:$0xff] %v109
    // Predicated region
    $region22: #{tpu_custom_call.1} parent=1 // pred_check
      %p112 = pneg %p52
    $region23: #{tpu_custom_call.1} parent=1 // pred_check_branch
      %114 = sbr.rel (%p112) target = $region25
    $region24: #{tpu_custom_call.1} parent=1 // pred_region
      %v115 = vld [vmem:[#allocation2] sm:$0xff]
      %v116 = vld [vmem:[#allocation2 + $0x8] sm:$0xff]
      %v117 = vadd.f32 %v115, %v116
      %118 = vadd.xlane.f32.xlu0 %v117
      %v119 = vpop.xlane.xlu0 %118
      %v120 = vrot.slane %v119, 4
      %v121 = vadd.f32 %v119, %v120
      %v122 = vrot.slane %v121, 2
      %v123 = vadd.f32 %v121, %v122
      %v124 = vrot.slane %v123, 1
      %v125 = vadd.f32 %v123, %v124
      %s126 = vtos %v125
      %s127 = scalar_lea.smem [#allocation8], 0
      %128 = sst [smem:[%s127]] %s126
    $region25: #{tpu_custom_call.1} parent=1 // pred_fallthru
      _
    // Predicated region
    $region26: #{tpu_custom_call.1} parent=1 // pred_check
      _
    $region27: #{tpu_custom_call.1} parent=1 // pred_check_branch
      %130 = sbr.rel (0) target = $region29
    $region28: #{tpu_custom_call.1} parent=1 // pred_region
      %s132 = ssub.s32 16, 16
      %133 = vsyncadd [#allocation5], %s132
      %136 = dma.smem_to_hbm [#allocation8], 16, %s2, [#allocation5]
    $region29: #{tpu_custom_call.1} parent=1 // pred_fallthru
      _
    // Predicated region
    $region30: #{tpu_custom_call.1} parent=1 // pred_check
      _
    $region31: #{tpu_custom_call.1} parent=1 // pred_check_branch
      %138 = sbr.rel (0) target = $region33
    $region32: #{tpu_custom_call.1} parent=1 // pred_region
      %139 = dma.done [#allocation5], 16
    $region33: #{tpu_custom_call.1} parent=1 // pred_fallthru
      _
    %140 = sfence
    %141 = vsyncpa [#allocation4], 1
    %142 = vsyncpa [#allocation7], 1
    %143 = vsyncpa [#allocation5], 1

</llo_original>
